<compile_context>
chip_gen: v7x
topology: tpu7x:2x2x1
jax: 0.10.0
libtpu: 0.0.40
codegen_flags: <defaults>
</compile_context>

<pallas_src>
import functools
import math

import jax
import jax.numpy as jnp
from jax import lax
from jax.experimental import pallas as pl
from jax.experimental.pallas import tpu as pltpu


def _round_up(x, m):
    return ((x + m - 1) // m) * m


def _flash_sdpa_kernel(q_ref, k_ref, v_ref, o_ref,
                       q_sc, m_sc, l_sc, acc_sc, *,
                       inv_sqrt_dim, kv_len, block_k, needs_mask, mask_value):
    # q_ref: (1, tq, D)  k_ref: (1, tk, D)  v_ref: (1, tk, Dv)  o_ref: (1, tq, Dv)
    # q_sc: (tq, D)  m_sc/l_sc: (tq, 1) f32  acc_sc: (tq, Dv) f32
    kv = pl.program_id(2)
    last_kv = pl.num_programs(2) - 1

    @pl.when(kv == 0)
    def _init():
        # Fold 1/sqrt(dim) into q once per q tile (q block is resident across kv).
        q_sc[...] = (q_ref[0].astype(jnp.float32) * inv_sqrt_dim).astype(q_sc.dtype)
        m_sc[...] = jnp.full_like(m_sc, -jnp.inf)
        l_sc[...] = jnp.zeros_like(l_sc)
        acc_sc[...] = jnp.zeros_like(acc_sc)

    k = k_ref[0]                         # (tk, D)
    v = v_ref[0]                         # (tk, Dv)

    # score tile = (q/sqrt(d)) @ k^T, contracting last dims (no transpose formed).
    s = lax.dot_general(q_sc[...], k, (((1,), (1,)), ((), ())),
                        preferred_element_type=jnp.float32)     # (tq, tk)

    def _update(s_tile):
        # Online softmax update of the running (m, l, acc) state.
        m_prev = m_sc[...]
        m_new = jnp.maximum(m_prev, jnp.max(s_tile, axis=-1, keepdims=True))
        alpha = jnp.exp(m_prev - m_new)
        p = jnp.exp(s_tile - m_new)
        l_sc[...] = alpha * l_sc[...] + jnp.sum(p, axis=-1, keepdims=True)
        acc_sc[...] = alpha * acc_sc[...] + jnp.dot(
            p.astype(v.dtype), v, preferred_element_type=jnp.float32)
        m_sc[...] = m_new

    if needs_mask:
        # Padding only lives in the last KV tile: apply a cheap (1, tk) additive
        # row bias there; all other steps run mask-free.
        @pl.when(kv != last_kv)
        def _plain():
            _update(s)

        @pl.when(kv == last_kv)
        def _masked():
            key_pos = kv * block_k + lax.broadcasted_iota(jnp.int32, (1, block_k), 1)
            bias = jnp.where(key_pos < kv_len, 0.0, mask_value).astype(jnp.float32)
            _update(s + bias)
    else:
        _update(s)

    @pl.when(kv == last_kv)
    def _finalize():
        inv_l = pl.reciprocal(l_sc[...], approx=False)   # off the hot loop; exact
        o_ref[0] = (acc_sc[...] * inv_l).astype(o_ref.dtype)


def scaled_dot_product_attention(query, key, value, dim, *,
                                 block_q=512, block_k=256):
    """Pallas flash-style implementation of ScaledDotProductAttention.forward.

    query: (B, Lq, D), key: (B, Lk, D), value: (B, Lk, Dv) -> (B, Lq, Dv)
    """
    B, Lq, D = query.shape
    Bk, Lk, Dk = key.shape
    Bv, Lkv, Dv = value.shape
    assert Bk == B and Bv == B and Dk == D and Lkv == Lk

    # Sublane minimum depends on element width (f32: 8, bf16: 16, int8/fp8: 32).
    itemsize = jnp.dtype(query.dtype).itemsize
    sub_min = {4: 8, 2: 16, 1: 32}.get(itemsize, 8)

    tq = min(_round_up(block_q, sub_min), _round_up(Lq, sub_min))
    tk = min(_round_up(block_k, 128), _round_up(Lk, 128))

    # Keep at least 2 steps on the "parallel" grid axes so both v7x TensorCores
    # get q tiles (matters when B == 1 with a short query).
    while B * ((Lq + tq - 1) // tq) < 2 and tq > sub_min:
        tq = max(sub_min, _round_up(tq // 2, sub_min))

    lq_pad = _round_up(Lq, tq)
    lk_pad = _round_up(Lk, tk)

    # Only pad / slice when shapes are unaligned (pads are extra XLA copies).
    if lq_pad != Lq:
        query = jnp.pad(query, ((0, 0), (0, lq_pad - Lq), (0, 0)))
    if lk_pad != Lk:
        key = jnp.pad(key, ((0, 0), (0, lk_pad - Lk), (0, 0)))
        value = jnp.pad(value, ((0, 0), (0, lk_pad - Lk), (0, 0)))

    grid = (B, lq_pad // tq, lk_pad // tk)

    kernel = functools.partial(
        _flash_sdpa_kernel,
        inv_sqrt_dim=float(1.0 / math.sqrt(dim)),
        kv_len=Lk,
        block_k=tk,
        needs_mask=(lk_pad != Lk),
        mask_value=float(jnp.finfo(jnp.float32).min),
    )

    # Advisory cost estimate: two matmuls + one exp per score element;
    # K/V are re-streamed once per q tile.
    n_q_tiles = lq_pad // tq
    cost = pl.CostEstimate(
        flops=int(2 * B * Lq * Lk * (D + Dv)),
        transcendentals=int(B * Lq * Lk),
        bytes_accessed=int(B * (Lq * D + n_q_tiles * Lk * (D + Dv) + Lq * Dv)
                           * itemsize),
    )

    out = pl.pallas_call(
        kernel,
        out_shape=jax.ShapeDtypeStruct((B, lq_pad, Dv), query.dtype),
        grid=grid,
        in_specs=[
            pl.BlockSpec((1, tq, D), lambda b, qi, ki: (b, qi, 0)),   # q resident over kv
            pl.BlockSpec((1, tk, D), lambda b, qi, ki: (b, ki, 0)),
            pl.BlockSpec((1, tk, Dv), lambda b, qi, ki: (b, ki, 0)),
        ],
        out_specs=pl.BlockSpec((1, tq, Dv), lambda b, qi, ki: (b, qi, 0)),
        scratch_shapes=[
            pltpu.VMEM((tq, D), query.dtype),    # pre-scaled q tile
            pltpu.VMEM((tq, 1), jnp.float32),    # running max m
            pltpu.VMEM((tq, 1), jnp.float32),    # running denom l
            pltpu.VMEM((tq, Dv), jnp.float32),   # un-normalised accumulator
        ],
        compiler_params=pltpu.CompilerParams(
            dimension_semantics=("parallel", "parallel", "arbitrary"),
            vmem_limit_bytes=48 * 1024 * 1024,   # tiles are small; fits all gens
        ),
        cost_estimate=cost,
    )(query, key, value)

    if lq_pad != Lq:
        out = out[:, :Lq, :]
    return out


def _reference(query, key, value, dim):
    score = jnp.einsum("bqd,bkd->bqk", query, key) / math.sqrt(dim)
    attn = jax.nn.softmax(score, axis=-1)
    return jnp.einsum("bqk,bkv->bqv", attn, value)


if __name__ == "__main__":
    rng = jax.random.PRNGKey(0)

    # Small shapes consistent with the module's forward: batch=2, seq=8, hidden=32.
    B, Lq, Lk, D = 2, 8, 8, 32
    dim = D  # ScaledDotProductAttention(dim=D)
    kq, kk, kv = jax.random.split(rng, 3)
    query = jax.random.normal(kq, (B, Lq, D), dtype=jnp.float32)
    key_t = jax.random.normal(kk, (B, Lk, D), dtype=jnp.float32)
    value = jax.random.normal(kv, (B, Lk, D), dtype=jnp.float32)

    out = scaled_dot_product_attention(query, key_t, value, dim)
    out = jax.block_until_ready(out)
    ref = _reference(query, key_t, value, dim)
    assert out.shape == ref.shape
    assert jnp.allclose(out, ref, atol=2e-3, rtol=2e-3), "mismatch vs reference (small)"

    # Larger shape exercising multi-tile online softmax, q padding, and the
    # last-KV-tile key mask (grid = (2, 1, 3) with 168 padded keys).
    B2, Lq2, Lk2, D2 = 2, 300, 600, 32
    kq2, kk2, kv2 = jax.random.split(jax.random.PRNGKey(1), 3)
    q2 = jax.random.normal(kq2, (B2, Lq2, D2), dtype=jnp.float32)
    k2 = jax.random.normal(kk2, (B2, Lk2, D2), dtype=jnp.float32)
    v2 = jax.random.normal(kv2, (B2, Lk2, D2), dtype=jnp.float32)

    out2 = scaled_dot_product_attention(q2, k2, v2, D2)
    out2 = jax.block_until_ready(out2)
    ref2 = _reference(q2, k2, v2, D2)
    assert out2.shape == ref2.shape
    assert jnp.allclose(out2, ref2, atol=2e-3, rtol=2e-3), "mismatch vs reference (tiled)"

    # Aligned shape taking the no-pad / no-mask fast path (grid = (2, 1, 2)).
    B3, Lq3, Lk3, D3 = 2, 256, 512, 32
    kq3, kk3, kv3 = jax.random.split(jax.random.PRNGKey(2), 3)
    q3 = jax.random.normal(kq3, (B3, Lq3, D3), dtype=jnp.float32)
    k3 = jax.random.normal(kk3, (B3, Lk3, D3), dtype=jnp.float32)
    v3 = jax.random.normal(kv3, (B3, Lk3, D3), dtype=jnp.float32)

    out3 = scaled_dot_product_attention(q3, k3, v3, D3)
    out3 = jax.block_until_ready(out3)
    ref3 = _reference(q3, k3, v3, D3)
    assert jnp.allclose(out3, ref3, atol=2e-3, rtol=2e-3), "mismatch vs reference (aligned)"

    print("KERNEL_OK")
</pallas_src>

<mosaic_0001>
module attributes {stable_mosaic.version = 11 : i64} {
  func.func @_flash_sdpa_kernel(%arg0: i32, %arg1: i32, %arg2: i32, %arg3: memref<1x8x32xf32, #tpu.memory_space<vmem>>, %arg4: memref<1x128x32xf32, #tpu.memory_space<vmem>>, %arg5: memref<1x128x32xf32, #tpu.memory_space<vmem>>, %arg6: memref<1x8x32xf32, #tpu.memory_space<vmem>>, %arg7: memref<8x32xf32, #tpu.memory_space<vmem>>, %arg8: memref<8x1xf32, #tpu.memory_space<vmem>>, %arg9: memref<8x1xf32, #tpu.memory_space<vmem>>, %arg10: memref<8x32xf32, #tpu.memory_space<vmem>>) attributes {dimension_semantics = [#tpu.dimension_semantics<parallel>, #tpu.dimension_semantics<parallel>, #tpu.dimension_semantics<arbitrary>], iteration_bounds = array<i64: 2, 1, 1>, scalar_prefetch = 0 : i64, scratch_operands = 4 : i64, tpu.core_type = #tpu.core_type<tc>, window_params = [{transform_indices = @transform_0, window_bounds = array<i64: 1, 8, 32>}, {transform_indices = @transform_1, window_bounds = array<i64: 1, 128, 32>}, {transform_indices = @transform_2, window_bounds = array<i64: 1, 128, 32>}, {transform_indices = @transform_3, window_bounds = array<i64: 1, 8, 32>}]} {
    %c0_i32 = arith.constant 0 : i32
    %0 = arith.cmpi eq, %arg2, %c0_i32 : i32
    %1 = arith.extui %0 : i1 to i32
    %c0_i32_0 = arith.constant 0 : i32
    %2 = arith.cmpi ne, %1, %c0_i32_0 : i32
    scf.if %2 {
      %c0_14 = arith.constant 0 : index
      %c0_15 = arith.constant 0 : index
      %c0_16 = arith.constant 0 : index
      %18 = vector.load %arg3[%c0_14, %c0_15, %c0_16] : memref<1x8x32xf32, #tpu.memory_space<vmem>>, vector<1x8x32xf32>
      %19 = vector.shape_cast %18 : vector<1x8x32xf32> to vector<8x32xf32>
      %cst_17 = arith.constant 0.176776692 : f32
      %20 = vector.broadcast %cst_17 : f32 to vector<8x32xf32>
      %21 = arith.mulf %19, %20 : vector<8x32xf32>
      %c0_18 = arith.constant 0 : index
      %c0_19 = arith.constant 0 : index
      %22 = vector.load %arg7[%c0_18, %c0_19] : memref<8x32xf32, #tpu.memory_space<vmem>>, vector<8x32xf32>
      tpu.vector_store %arg7[%c0_18, %c0_19], %21 {strides = array<i32>} : memref<8x32xf32, #tpu.memory_space<vmem>>, vector<8x32xf32>,
      %cst_20 = arith.constant 0xFF800000 : f32
      %23 = vector.broadcast %cst_20 : f32 to vector<8x1xf32>
      %c0_21 = arith.constant 0 : index
      %c0_22 = arith.constant 0 : index
      %24 = vector.load %arg8[%c0_21, %c0_22] : memref<8x1xf32, #tpu.memory_space<vmem>>, vector<8x1xf32>
      tpu.vector_store %arg8[%c0_21, %c0_22], %23 {strides = array<i32>} : memref<8x1xf32, #tpu.memory_space<vmem>>, vector<8x1xf32>,
      %cst_23 = arith.constant 0.000000e+00 : f32
      %25 = vector.broadcast %cst_23 : f32 to vector<8x1xf32>
      %c0_24 = arith.constant 0 : index
      %c0_25 = arith.constant 0 : index
      %26 = vector.load %arg9[%c0_24, %c0_25] : memref<8x1xf32, #tpu.memory_space<vmem>>, vector<8x1xf32>
      tpu.vector_store %arg9[%c0_24, %c0_25], %25 {strides = array<i32>} : memref<8x1xf32, #tpu.memory_space<vmem>>, vector<8x1xf32>,
      %cst_26 = arith.constant 0.000000e+00 : f32
      %27 = vector.broadcast %cst_26 : f32 to vector<8x32xf32>
      %c0_27 = arith.constant 0 : index
      %c0_28 = arith.constant 0 : index
      %28 = vector.load %arg10[%c0_27, %c0_28] : memref<8x32xf32, #tpu.memory_space<vmem>>, vector<8x32xf32>
      tpu.vector_store %arg10[%c0_27, %c0_28], %27 {strides = array<i32>} : memref<8x32xf32, #tpu.memory_space<vmem>>, vector<8x32xf32>,
    } else {
    }
    %c0 = arith.constant 0 : index
    %c0_1 = arith.constant 0 : index
    %c0_2 = arith.constant 0 : index
    %3 = vector.load %arg4[%c0, %c0_1, %c0_2] : memref<1x128x32xf32, #tpu.memory_space<vmem>>, vector<1x128x32xf32>
    %4 = vector.shape_cast %3 : vector<1x128x32xf32> to vector<128x32xf32>
    %c0_3 = arith.constant 0 : index
    %c0_4 = arith.constant 0 : index
    %c0_5 = arith.constant 0 : index
    %5 = vector.load %arg5[%c0_3, %c0_4, %c0_5] : memref<1x128x32xf32, #tpu.memory_space<vmem>>, vector<1x128x32xf32>
    %6 = vector.shape_cast %5 : vector<1x128x32xf32> to vector<128x32xf32>
    %c0_6 = arith.constant 0 : index
    %c0_7 = arith.constant 0 : index
    %7 = vector.load %arg7[%c0_6, %c0_7] : memref<8x32xf32, #tpu.memory_space<vmem>>, vector<8x32xf32>
    %cst = arith.constant dense<0.000000e+00> : vector<8x128xf32>
    %8 = tpu.matmul %7, %4, %cst {dimension_numbers = #tpu.dot_dimension_numbers<[1], [1], [0], [0], [0, 0, 1, 0], [], []>} : vector<8x32xf32>, vector<128x32xf32>, vector<8x128xf32> -> vector<8x128xf32>
    %c0_i32_8 = arith.constant 0 : i32
    %9 = arith.cmpi ne, %arg2, %c0_i32_8 : i32
    %10 = arith.extui %9 : i1 to i32
    %c0_i32_9 = arith.constant 0 : i32
    %11 = arith.cmpi ne, %10, %c0_i32_9 : i32
    scf.if %11 {
      %c0_14 = arith.constant 0 : index
      %c0_15 = arith.constant 0 : index
      %18 = vector.load %arg8[%c0_14, %c0_15] : memref<8x1xf32, #tpu.memory_space<vmem>>, vector<8x1xf32>
      %cst_16 = arith.constant dense<0xFF800000> : vector<8xf32>
      %19 = vector.multi_reduction <maximumf>, %8, %cst_16 [1] : vector<8x128xf32> to vector<8xf32>
      %20 = vector.shape_cast %19 : vector<8xf32> to vector<8x1xf32>
      %21 = arith.maximumf %18, %20 : vector<8x1xf32>
      %22 = arith.subf %18, %21 : vector<8x1xf32>
      %23 = math.exp %22 : vector<8x1xf32>
      %24 = vector.broadcast %21 : vector<8x1xf32> to vector<8x128xf32>
      %25 = arith.subf %8, %24 : vector<8x128xf32>
      %26 = math.exp %25 : vector<8x128xf32>
      %c0_17 = arith.constant 0 : index
      %c0_18 = arith.constant 0 : index
      %27 = vector.load %arg9[%c0_17, %c0_18] : memref<8x1xf32, #tpu.memory_space<vmem>>, vector<8x1xf32>
      %28 = arith.mulf %23, %27 : vector<8x1xf32>
      %cst_19 = arith.constant dense<0.000000e+00> : vector<8xf32>
      %29 = vector.multi_reduction <add>, %26, %cst_19 [1] : vector<8x128xf32> to vector<8xf32>
      %30 = vector.shape_cast %29 : vector<8xf32> to vector<8x1xf32>
      %31 = arith.addf %28, %30 : vector<8x1xf32>
      %c0_20 = arith.constant 0 : index
      %c0_21 = arith.constant 0 : index
      %32 = vector.load %arg9[%c0_20, %c0_21] : memref<8x1xf32, #tpu.memory_space<vmem>>, vector<8x1xf32>
      tpu.vector_store %arg9[%c0_20, %c0_21], %31 {strides = array<i32>} : memref<8x1xf32, #tpu.memory_space<vmem>>, vector<8x1xf32>,
      %c0_22 = arith.constant 0 : index
      %c0_23 = arith.constant 0 : index
      %33 = vector.load %arg10[%c0_22, %c0_23] : memref<8x32xf32, #tpu.memory_space<vmem>>, vector<8x32xf32>
      %34 = vector.broadcast %23 : vector<8x1xf32> to vector<8x32xf32>
      %35 = arith.mulf %34, %33 : vector<8x32xf32>
      %cst_24 = arith.constant dense<0.000000e+00> : vector<8x32xf32>
      %36 = tpu.matmul %26, %6, %cst_24 {dimension_numbers = #tpu.dot_dimension_numbers<[1], [0], [0], [1], [0, 0, 1, 1], [], []>} : vector<8x128xf32>, vector<128x32xf32>, vector<8x32xf32> -> vector<8x32xf32>
      %37 = arith.addf %35, %36 : vector<8x32xf32>
      %c0_25 = arith.constant 0 : index
      %c0_26 = arith.constant 0 : index
      %38 = vector.load %arg10[%c0_25, %c0_26] : memref<8x32xf32, #tpu.memory_space<vmem>>, vector<8x32xf32>
      tpu.vector_store %arg10[%c0_25, %c0_26], %37 {strides = array<i32>} : memref<8x32xf32, #tpu.memory_space<vmem>>, vector<8x32xf32>,
      %c0_27 = arith.constant 0 : index
      %c0_28 = arith.constant 0 : index
      %39 = vector.load %arg8[%c0_27, %c0_28] : memref<8x1xf32, #tpu.memory_space<vmem>>, vector<8x1xf32>
      tpu.vector_store %arg8[%c0_27, %c0_28], %21 {strides = array<i32>} : memref<8x1xf32, #tpu.memory_space<vmem>>, vector<8x1xf32>,
    } else {
    }
    %c0_i32_10 = arith.constant 0 : i32
    %12 = arith.cmpi eq, %arg2, %c0_i32_10 : i32
    %13 = arith.extui %12 : i1 to i32
    %c0_i32_11 = arith.constant 0 : i32
    %14 = arith.cmpi ne, %13, %c0_i32_11 : i32
    scf.if %14 {
      %c128_i32 = arith.constant 128 : i32
      %18 = arith.muli %arg2, %c128_i32 : i32
      %19 = tpu.iota {dimensions = array<i32: 1>} : vector<1x128xi32>
      %20 = vector.broadcast %18 : i32 to vector<1x128xi32>
      %21 = arith.addi %20, %19 : vector<1x128xi32>
      %c8_i32 = arith.constant 8 : i32
      %22 = vector.broadcast %c8_i32 : i32 to vector<1x128xi32>
      %23 = arith.cmpi slt, %21, %22 : vector<1x128xi32>
      %cst_14 = arith.constant 0.000000e+00 : f32
      %cst_15 = arith.constant -3.40282347E+38 : f32
      %24 = vector.broadcast %cst_14 : f32 to vector<1x128xf32>
      %25 = vector.broadcast %cst_15 : f32 to vector<1x128xf32>
      %26 = arith.select %23, %24, %25 : vector<1x128xi1>, vector<1x128xf32>
      %27 = vector.broadcast %26 : vector<1x128xf32> to vector<8x128xf32>
      %28 = arith.addf %8, %27 : vector<8x128xf32>
      %c0_16 = arith.constant 0 : index
      %c0_17 = arith.constant 0 : index
      %29 = vector.load %arg8[%c0_16, %c0_17] : memref<8x1xf32, #tpu.memory_space<vmem>>, vector<8x1xf32>
      %cst_18 = arith.constant dense<0xFF800000> : vector<8xf32>
      %30 = vector.multi_reduction <maximumf>, %28, %cst_18 [1] : vector<8x128xf32> to vector<8xf32>
      %31 = vector.shape_cast %30 : vector<8xf32> to vector<8x1xf32>
      %32 = arith.maximumf %29, %31 : vector<8x1xf32>
      %33 = arith.subf %29, %32 : vector<8x1xf32>
      %34 = math.exp %33 : vector<8x1xf32>
      %35 = vector.broadcast %32 : vector<8x1xf32> to vector<8x128xf32>
      %36 = arith.subf %28, %35 : vector<8x128xf32>
      %37 = math.exp %36 : vector<8x128xf32>
      %c0_19 = arith.constant 0 : index
      %c0_20 = arith.constant 0 : index
      %38 = vector.load %arg9[%c0_19, %c0_20] : memref<8x1xf32, #tpu.memory_space<vmem>>, vector<8x1xf32>
      %39 = arith.mulf %34, %38 : vector<8x1xf32>
      %cst_21 = arith.constant dense<0.000000e+00> : vector<8xf32>
      %40 = vector.multi_reduction <add>, %37, %cst_21 [1] : vector<8x128xf32> to vector<8xf32>
      %41 = vector.shape_cast %40 : vector<8xf32> to vector<8x1xf32>
      %42 = arith.addf %39, %41 : vector<8x1xf32>
      %c0_22 = arith.constant 0 : index
      %c0_23 = arith.constant 0 : index
      %43 = vector.load %arg9[%c0_22, %c0_23] : memref<8x1xf32, #tpu.memory_space<vmem>>, vector<8x1xf32>
      tpu.vector_store %arg9[%c0_22, %c0_23], %42 {strides = array<i32>} : memref<8x1xf32, #tpu.memory_space<vmem>>, vector<8x1xf32>,
      %c0_24 = arith.constant 0 : index
      %c0_25 = arith.constant 0 : index
      %44 = vector.load %arg10[%c0_24, %c0_25] : memref<8x32xf32, #tpu.memory_space<vmem>>, vector<8x32xf32>
      %45 = vector.broadcast %34 : vector<8x1xf32> to vector<8x32xf32>
      %46 = arith.mulf %45, %44 : vector<8x32xf32>
      %cst_26 = arith.constant dense<0.000000e+00> : vector<8x32xf32>
      %47 = tpu.matmul %37, %6, %cst_26 {dimension_numbers = #tpu.dot_dimension_numbers<[1], [0], [0], [1], [0, 0, 1, 1], [], []>} : vector<8x128xf32>, vector<128x32xf32>, vector<8x32xf32> -> vector<8x32xf32>
      %48 = arith.addf %46, %47 : vector<8x32xf32>
      %c0_27 = arith.constant 0 : index
      %c0_28 = arith.constant 0 : index
      %49 = vector.load %arg10[%c0_27, %c0_28] : memref<8x32xf32, #tpu.memory_space<vmem>>, vector<8x32xf32>
      tpu.vector_store %arg10[%c0_27, %c0_28], %48 {strides = array<i32>} : memref<8x32xf32, #tpu.memory_space<vmem>>, vector<8x32xf32>,
      %c0_29 = arith.constant 0 : index
      %c0_30 = arith.constant 0 : index
      %50 = vector.load %arg8[%c0_29, %c0_30] : memref<8x1xf32, #tpu.memory_space<vmem>>, vector<8x1xf32>
      tpu.vector_store %arg8[%c0_29, %c0_30], %32 {strides = array<i32>} : memref<8x1xf32, #tpu.memory_space<vmem>>, vector<8x1xf32>,
    } else {
    }
    %c0_i32_12 = arith.constant 0 : i32
    %15 = arith.cmpi eq, %arg2, %c0_i32_12 : i32
    %16 = arith.extui %15 : i1 to i32
    %c0_i32_13 = arith.constant 0 : i32
    %17 = arith.cmpi ne, %16, %c0_i32_13 : i32
    scf.if %17 {
      %c0_14 = arith.constant 0 : index
      %c0_15 = arith.constant 0 : index
      %18 = vector.load %arg9[%c0_14, %c0_15] : memref<8x1xf32, #tpu.memory_space<vmem>>, vector<8x1xf32>
      %19 = tpu.reciprocal %18 : vector<8x1xf32> -> vector<8x1xf32>
      %c0_16 = arith.constant 0 : index
      %c0_17 = arith.constant 0 : index
      %20 = vector.load %arg10[%c0_16, %c0_17] : memref<8x32xf32, #tpu.memory_space<vmem>>, vector<8x32xf32>
      %21 = vector.broadcast %19 : vector<8x1xf32> to vector<8x32xf32>
      %22 = arith.mulf %20, %21 : vector<8x32xf32>
      %c0_18 = arith.constant 0 : index
      %c0_19 = arith.constant 0 : index
      %c0_20 = arith.constant 0 : index
      %23 = vector.load %arg6[%c0_18, %c0_19, %c0_20] : memref<1x8x32xf32, #tpu.memory_space<vmem>>, vector<1x8x32xf32>
      %24 = vector.shape_cast %23 : vector<1x8x32xf32> to vector<8x32xf32>
      %25 = vector.shape_cast %22 : vector<8x32xf32> to vector<1x8x32xf32>
      tpu.vector_store %arg6[%c0_18, %c0_19, %c0_20], %25 {strides = array<i32>} : memref<1x8x32xf32, #tpu.memory_space<vmem>>, vector<1x8x32xf32>,
    } else {
    }
    return
  }
  func.func @transform_0(%arg0: i32, %arg1: i32, %arg2: i32) -> (i32, i32, i32) {
    %c0_i32 = arith.constant 0 : i32
    %c0_i32_0 = arith.constant 0 : i32
    return %arg0, %arg1, %c0_i32 : i32, i32, i32
  }
  func.func @transform_1(%arg0: i32, %arg1: i32, %arg2: i32) -> (i32, i32, i32) {
    %c0_i32 = arith.constant 0 : i32
    %c0_i32_0 = arith.constant 0 : i32
    return %arg0, %arg2, %c0_i32 : i32, i32, i32
  }
  func.func @transform_2(%arg0: i32, %arg1: i32, %arg2: i32) -> (i32, i32, i32) {
    %c0_i32 = arith.constant 0 : i32
    %c0_i32_0 = arith.constant 0 : i32
    return %arg0, %arg2, %c0_i32 : i32, i32, i32
  }
  func.func @transform_3(%arg0: i32, %arg1: i32, %arg2: i32) -> (i32, i32, i32) {
    %c0_i32 = arith.constant 0 : i32
    %c0_i32_0 = arith.constant 0 : i32
    return %arg0, %arg1, %c0_i32 : i32, i32, i32
  }
}

</mosaic_0001>

<llo_original>
// kernel: tpu_custom_call.1
$region0: #{tpu_custom_call.1}
  #allocation0 [shape = 'u32[]', space=smem, size = 0x4, offset = 0x4, fixed_abs, tag = 'smem constant byte address 0x4 - core index']
  #allocation1 [shape = 'u32[144,128]{1,0:T(1,128)}', space=vmem, size = 0x12000, scoped, tag = 'internal scratch']
  #allocation2 [shape = 'f32[8,32]{1,0:T(8,128)}', space=vmem, size = 0x1000, scoped, tag = 'scratch operand']
  #allocation3 [shape = 'f32[8,1]{1,0:T(8,128)}', space=vmem, size = 0x1000, scoped, tag = 'scratch operand']
  #allocation4 [shape = 'f32[8,1]{1,0:T(8,128)}', space=vmem, size = 0x1000, scoped, tag = 'scratch operand']
  #allocation5 [shape = 'f32[8,32]{1,0:T(8,128)}', space=vmem, size = 0x1000, scoped, tag = 'scratch operand']
  %s0 = inlined_call_operand.vmem [shape: f32[2,8,32], index: 0, kind: input, shape index: {}]
  %s1 = inlined_call_operand.vmem [shape: f32[2,128,32], index: 1, kind: input, shape index: {}]
  %s2 = inlined_call_operand.vmem [shape: f32[2,128,32], index: 2, kind: input, shape index: {}]
  %s3 = inlined_call_operand.hbm [shape: f32[2,8,32], index: 3, kind: output, shape index: {}]
  %s4 = sld [smem:[#allocation0]]
  $region57: #{tpu_custom_call.1} parent=0
    _
  %s6 = ssub.s32 1, %s4
  %s7 = scalar_select 0, %s6, %s4
  $region1: #{tpu_custom_call.1} parent=0
    #allocation6 [shape = 'u8[8192]{0}', space=vmem, size = 0x2000, scoped, tag = 'output window, operand 0']
    #allocation7 [shape = 's32[2]{0}', space=sflag, size = 0x8, scoped, tag = 'scoped memory for tpu_custom_call.1']
    %8 = vsyncpa [#allocation7], 0
    %s9 = scalar_lea.sflag [#allocation7], 1
    %10 = vsyncpa %s9, 0
    loop: start=0, step=1, limit=4
    $region2: #{tpu_custom_call.1} parent=1 // loop_pre_header
      _
    $region3: #{tpu_custom_call.1} parent=1 // loop_header
      %s12 = sphi 0, %s16
      %p13 = scmp.ge.s32.totalorder %s12, 4
      %s19 = sphi 0, %s38
      %s20 = sphi 0, %s34
      %s21 = sphi 0, %s30
      %s22 = sphi 0, %s19
      %s23 = sphi 0, %s20
      %s24 = sphi 0, %s21
      %s25 = sphi 0, %s22
      %s26 = sphi 0, %s23
      %s27 = sphi 0, %s24
      %s43 = sphi 0, %s45
      %s46 = sphi 0, %s43
      %s47 = sphi 0, %s46
      %s63 = sphi 0, %s47
      %s71 = sphi 0, %s73
      %s74 = sphi 0, %s71
      %s75 = sphi 0, %s74
      %s91 = sphi 0, %s75
      %s99 = sphi 0, %s101
      %s102 = sphi 0, %s99
      %s103 = sphi 0, %s102
      %s119 = sphi 0, %s103
      %s127 = sphi 0, %s129
      %s130 = sphi 0, %s127
      %s131 = sphi 0, %s130
      %s147 = sphi 0, %s131
    $region4: #{tpu_custom_call.1} parent=1 // loop_header_branch
      %15 = sbr.rel (%p13) target = $region8
    $region5: #{tpu_custom_call.1} parent=1 // loop_body
      %s17 = ssub.s32 %s12, 1
      %s18 = ssub.s32 %s12, 2
      %s28 = sadd.s32 1, %s21
      %p29 = scmp.ge.s32.totalorder %s28, 1
      %s30 = scalar_select %p29, 0, %s28
      %s31 = sadd.s32 1, %s20
      %s32 = scalar_select %p29, %s31, %s20
      %p33 = scmp.ge.s32.totalorder %s32, 1
      %s34 = scalar_select %p33, 0, %s32
      %s35 = sadd.s32 1, %s19
      %s36 = scalar_select %p33, %s35, %s19
      %p37 = scmp.ge.s32.totalorder %s36, 2
      %s38 = scalar_select %p37, 0, %s36
      %s39 = ssub.s32 %s19, %s38
      %s40 = ssub.s32 %s20, %s34
      %s41 = sor.u32 %s39, %s40
      %p42 = scmp.eq.s32.totalorder %s41, 0
      %s44 = sadd.s32 %s43, 1
      %s45 = scalar_select %p42, %s43, %s44
      %p48 = pneg %p42
      %p49 = scmp.eq.s32.totalorder %s12, 1
      %p50 = por %p48, %p49
      %p51 = scmp.ne.s32.totalorder %s43, %s46
      %p52 = scmp.eq.s32.totalorder %s12, 0
      %p53 = por %p51, %p52
      %p54 = scmp.ne.s32.totalorder %s43, %s46
      %p55 = scmp.eq.s32.totalorder %s17, 1
      %p56 = por %p54, %p55
      %p57 = scmp.ne.s32.totalorder %s46, %s47
      %p58 = scmp.eq.s32.totalorder %s17, 0
      %p59 = por %p57, %p58
      %p60 = scmp.ne.s32.totalorder %s46, %s47
      %p61 = scmp.eq.s32.totalorder %s18, 1
      %p62 = por %p60, %p61
      %p64 = scmp.ne.s32.totalorder %s47, %s63
      %p65 = scmp.eq.s32.totalorder %s18, 0
      %p66 = por %p64, %p65
      %s67 = ssub.s32 %s19, %s38
      %s68 = ssub.s32 %s21, %s30
      %s69 = sor.u32 %s67, %s68
      %p70 = scmp.eq.s32.totalorder %s69, 0
      %s72 = sadd.s32 %s71, 1
      %s73 = scalar_select %p70, %s71, %s72
      %p76 = pneg %p70
      %p77 = scmp.eq.s32.totalorder %s12, 1
      %p78 = por %p76, %p77
      %p79 = scmp.ne.s32.totalorder %s71, %s74
      %p80 = scmp.eq.s32.totalorder %s12, 0
      %p81 = por %p79, %p80
      %p82 = scmp.ne.s32.totalorder %s71, %s74
      %p83 = scmp.eq.s32.totalorder %s17, 1
      %p84 = por %p82, %p83
      %p85 = scmp.ne.s32.totalorder %s74, %s75
      %p86 = scmp.eq.s32.totalorder %s17, 0
      %p87 = por %p85, %p86
      %p88 = scmp.ne.s32.totalorder %s74, %s75
      %p89 = scmp.eq.s32.totalorder %s18, 1
      %p90 = por %p88, %p89
      %p92 = scmp.ne.s32.totalorder %s75, %s91
      %p93 = scmp.eq.s32.totalorder %s18, 0
      %p94 = por %p92, %p93
      %s95 = ssub.s32 %s19, %s38
      %s96 = ssub.s32 %s21, %s30
      %s97 = sor.u32 %s95, %s96
      %p98 = scmp.eq.s32.totalorder %s97, 0
      %s100 = sadd.s32 %s99, 1
      %s101 = scalar_select %p98, %s99, %s100
      %p104 = pneg %p98
      %p105 = scmp.eq.s32.totalorder %s12, 1
      %p106 = por %p104, %p105
      %p107 = scmp.ne.s32.totalorder %s99, %s102
      %p108 = scmp.eq.s32.totalorder %s12, 0
      %p109 = por %p107, %p108
      %p110 = scmp.ne.s32.totalorder %s99, %s102
      %p111 = scmp.eq.s32.totalorder %s17, 1
      %p112 = por %p110, %p111
      %p113 = scmp.ne.s32.totalorder %s102, %s103
      %p114 = scmp.eq.s32.totalorder %s17, 0
      %p115 = por %p113, %p114
      %p116 = scmp.ne.s32.totalorder %s102, %s103
      %p117 = scmp.eq.s32.totalorder %s18, 1
      %p118 = por %p116, %p117
      %p120 = scmp.ne.s32.totalorder %s103, %s119
      %p121 = scmp.eq.s32.totalorder %s18, 0
      %p122 = por %p120, %p121
      %s123 = ssub.s32 %s19, %s38
      %s124 = ssub.s32 %s20, %s34
      %s125 = sor.u32 %s123, %s124
      %p126 = scmp.eq.s32.totalorder %s125, 0
      %s128 = sadd.s32 %s127, 1
      %s129 = scalar_select %p126, %s127, %s128
      %p132 = pneg %p126
      %p133 = scmp.eq.s32.totalorder %s12, 1
      %p134 = por %p132, %p133
      %p135 = scmp.ne.s32.totalorder %s127, %s130
      %p136 = scmp.eq.s32.totalorder %s12, 0
      %p137 = por %p135, %p136
      %p138 = scmp.ne.s32.totalorder %s127, %s130
      %p139 = scmp.eq.s32.totalorder %s17, 1
      %p140 = por %p138, %p139
      %p141 = scmp.ne.s32.totalorder %s130, %s131
      %p142 = scmp.eq.s32.totalorder %s17, 0
      %p143 = por %p141, %p142
      %p144 = scmp.ne.s32.totalorder %s130, %s131
      %p145 = scmp.eq.s32.totalorder %s18, 1
      %p146 = por %p144, %p145
      %p148 = scmp.ne.s32.totalorder %s131, %s147
      %p149 = scmp.eq.s32.totalorder %s18, 0
      %p150 = por %p148, %p149
      %p151 = scmp.le.s32.totalorder 1, %s12
      %p152 = scmp.lt.s32.totalorder %s12, 3
      %p153 = pnand %p151, %p152
      %p154 = pneg %p153
      // Predicated region
      $region9: #{tpu_custom_call.1} parent=5 // pred_check
        _
      $region10: #{tpu_custom_call.1} parent=5 // pred_check_branch
        %156 = sbr.rel (%p153) target = $region12
      $region11: #{tpu_custom_call.1} parent=5 // pred_region
        %s157 = ssub.s32 %s12, 1
      $region12: #{tpu_custom_call.1} parent=5 // pred_fallthru
        _
      %p158 = scmp.lt.s32.totalorder %s12, 2
      // Predicated region
      $region13: #{tpu_custom_call.1} parent=5 // pred_check
        %p159 = pneg %p158
      $region14: #{tpu_custom_call.1} parent=5 // pred_check_branch
        %161 = sbr.rel (%p159) target = $region16
      $region15: #{tpu_custom_call.1} parent=5 // pred_region
        // Predicated region
        $region17: #{tpu_custom_call.1} parent=15 // pred_check
          %p162 = pneg %p53
        $region18: #{tpu_custom_call.1} parent=15 // pred_check_branch
          %164 = sbr.rel (%p162) target = $region20
        $region19: #{tpu_custom_call.1} parent=15 // pred_region
          %p165 = scmp.lt.s32.totalorder %s19, 1
          %s166 = scalar_select %p165, %s19, 1
          %p167 = scmp.lt.s32.totalorder %s20, 0
          %s168 = scalar_select %p167, %s20, 0
          %s169 = sadd.s32 %s168, %s166
          %s170 = smul.addr %s169, 8
          %s171 = scalar_lea.vmem %s0, %s170
        $region20: #{tpu_custom_call.1} parent=15 // pred_fallthru
          _
        // Predicated region
        $region21: #{tpu_custom_call.1} parent=15 // pred_check
          %p172 = pneg %p81
        $region22: #{tpu_custom_call.1} parent=15 // pred_check_branch
          %174 = sbr.rel (%p172) target = $region24
        $region23: #{tpu_custom_call.1} parent=15 // pred_region
          %s175 = smul.u32 16, %s21
          %p176 = scmp.lt.s32.totalorder %s19, 1
          %s177 = scalar_select %p176, %s19, 1
          %p178 = scmp.lt.s32.totalorder %s175, 15
          %s179 = scalar_select %p178, %s175, 15
          %s180 = smul.addr %s177, 16
          %s181 = sadd.s32 %s179, %s180
          %s182 = smul.addr %s181, 8
          %s183 = scalar_lea.vmem %s1, %s182
          %s184 = smul.u32 16, %s21
        $region24: #{tpu_custom_call.1} parent=15 // pred_fallthru
          _
        // Predicated region
        $region25: #{tpu_custom_call.1} parent=15 // pred_check
          %p185 = pneg %p109
        $region26: #{tpu_custom_call.1} parent=15 // pred_check_branch
          %187 = sbr.rel (%p185) target = $region28
        $region27: #{tpu_custom_call.1} parent=15 // pred_region
          %s188 = smul.u32 16, %s21
          %p189 = scmp.lt.s32.totalorder %s19, 1
          %s190 = scalar_select %p189, %s19, 1
          %p191 = scmp.lt.s32.totalorder %s188, 15
          %s192 = scalar_select %p191, %s188, 15
          %s193 = smul.addr %s190, 16
          %s194 = sadd.s32 %s192, %s193
          %s195 = smul.addr %s194, 8
          %s196 = scalar_lea.vmem %s2, %s195
          %s197 = smul.u32 16, %s21
        $region28: #{tpu_custom_call.1} parent=15 // pred_fallthru
          _
      $region16: #{tpu_custom_call.1} parent=5 // pred_fallthru
        _
      %p198 = scmp.le.s32.totalorder 1, %s12
      %p199 = scmp.lt.s32.totalorder %s12, 3
      %p200 = pnand %p198, %p199
      %p201 = pneg %p200
      // Predicated region
      $region29: #{tpu_custom_call.1} parent=5 // pred_check
        _
      $region30: #{tpu_custom_call.1} parent=5 // pred_check_branch
        %203 = sbr.rel (%p200) target = $region32
      $region31: #{tpu_custom_call.1} parent=5 // pred_region
        %s204 = ssub.s32 %s12, 1
        %p205 = scmp.lt.s32.totalorder %s22, 1
        %s206 = scalar_select %p205, %s22, 1
        %p207 = scmp.lt.s32.totalorder %s23, 0
        %s208 = scalar_select %p207, %s23, 0
        %s209 = sadd.s32 %s208, %s206
        %s210 = smul.addr %s209, 8
        %s211 = scalar_lea.vmem %s0, %s210
        %p212 = pneg %p59
        %p213 = pneg %p56
        %s214 = smul.u32 16, %s24
        %p215 = scmp.lt.s32.totalorder %s22, 1
        %s216 = scalar_select %p215, %s22, 1
        %p217 = scmp.lt.s32.totalorder %s214, 15
        %s218 = scalar_select %p217, %s214, 15
        %s219 = smul.addr %s216, 16
        %s220 = sadd.s32 %s218, %s219
        %s221 = smul.addr %s220, 8
        %s222 = scalar_lea.vmem %s1, %s221
        %p223 = pneg %p87
        %p224 = pneg %p84
        %s225 = smul.u32 16, %s24
        %p226 = scmp.lt.s32.totalorder %s22, 1
        %s227 = scalar_select %p226, %s22, 1
        %p228 = scmp.lt.s32.totalorder %s225, 15
        %s229 = scalar_select %p228, %s225, 15
        %s230 = smul.addr %s227, 16
        %s231 = sadd.s32 %s229, %s230
        %s232 = smul.addr %s231, 8
        %s233 = scalar_lea.vmem %s2, %s232
        %p234 = pneg %p115
        %p235 = pneg %p112
        %p236 = pneg %p143
        %p237 = pneg %p140
        %s238 = sand.u32 %s130, 1
        %s239 = scalar_lea.sflag [#allocation7], %s238
        %s240 = sand.u32 %s130, 1
        %s241 = smul.addr %s240, 8
        %s242 = scalar_lea.vmem [#allocation6], %s241
        %p243 = scmp.lt.s32.totalorder %s22, 1
        %s244 = scalar_select %p243, %s22, 1
        %p245 = scmp.lt.s32.totalorder %s23, 0
        %s246 = scalar_select %p245, %s23, 0
        %s247 = sadd.s32 %s246, %s244
        %s248 = smul.addr %s247, 8
        %s249 = scalar_lea.vmem %s0, %s248
        %s250 = smul.u32 16, %s24
        %p251 = scmp.lt.s32.totalorder %s22, 1
        %s252 = scalar_select %p251, %s22, 1
        %p253 = scmp.lt.s32.totalorder %s250, 15
        %s254 = scalar_select %p253, %s250, 15
        %s255 = smul.addr %s252, 16
        %s256 = sadd.s32 %s254, %s255
        %s257 = smul.addr %s256, 8
        %s258 = scalar_lea.vmem %s1, %s257
        %s259 = smul.u32 16, %s24
        %s260 = smul.u32 16, %s24
        %p261 = scmp.lt.s32.totalorder %s22, 1
        %s262 = scalar_select %p261, %s22, 1
        %p263 = scmp.lt.s32.totalorder %s260, 15
        %s264 = scalar_select %p263, %s260, 15
        %s265 = smul.addr %s262, 16
        %s266 = sadd.s32 %s264, %s265
        %s267 = smul.addr %s266, 8
        %s268 = scalar_lea.vmem %s2, %s267
        %s269 = smul.u32 16, %s24
        %p270 = scmp.eq.s32.totalorder %s24, 0
        // Predicated region
        $region33: #{tpu_custom_call.1} parent=31 // pred_check
          %p271 = pneg %p270
        $region34: #{tpu_custom_call.1} parent=31 // pred_check_branch
          %273 = sbr.rel (%p271) target = $region36
        $region35: #{tpu_custom_call.1} parent=31 // pred_region
          %v274 = vld [vmem:[%s249] sm:$0xff]
          %v275 = vmul.f32 %v274, 0.17677669
          %vm276 = vcmask 261120
          %277 = vst.msk [vmem:[#allocation2] sm:$0xff] %vm276, %v275
          %vm278 = vcmask 7168
          %279 = vst.msk [vmem:[#allocation3] sm:$0xff] %vm278, -inf
          %280 = vst.msk [vmem:[#allocation4] sm:$0xff] %vm278, 0.0
          %281 = vst.msk [vmem:[#allocation5] sm:$0xff] %vm276, 0.0
        $region36: #{tpu_custom_call.1} parent=31 // pred_fallthru
          _
        %v282 = vld [vmem:[%s258] sm:$0xff]
        %v283 = vld [vmem:[%s258 + $0x8] sm:$0xff]
        %v284 = vld [vmem:[%s258 + $0x10] sm:$0xff]
        %v285 = vld [vmem:[%s258 + $0x18] sm:$0xff]
        %v286 = vld [vmem:[%s258 + $0x20] sm:$0xff]
        %v287 = vld [vmem:[%s258 + $0x28] sm:$0xff]
        %v288 = vld [vmem:[%s258 + $0x30] sm:$0xff]
        %v289 = vld [vmem:[%s258 + $0x38] sm:$0xff]
        %v290 = vld [vmem:[%s258 + $0x40] sm:$0xff]
        %v291 = vld [vmem:[%s258 + $0x48] sm:$0xff]
        %v292 = vld [vmem:[%s258 + $0x50] sm:$0xff]
        %v293 = vld [vmem:[%s258 + $0x58] sm:$0xff]
        %v294 = vld [vmem:[%s258 + $0x60] sm:$0xff]
        %v295 = vld [vmem:[%s258 + $0x68] sm:$0xff]
        %v296 = vld [vmem:[%s258 + $0x70] sm:$0xff]
        %v297 = vld [vmem:[%s258 + $0x78] sm:$0xff]
        %v298 = vld [vmem:[%s268] sm:$0xff]
        %v299 = vld [vmem:[%s268 + $0x8] sm:$0xff]
        %v300 = vld [vmem:[%s268 + $0x10] sm:$0xff]
        %v301 = vld [vmem:[%s268 + $0x18] sm:$0xff]
        %v302 = vld [vmem:[%s268 + $0x20] sm:$0xff]
        %v303 = vld [vmem:[%s268 + $0x28] sm:$0xff]
        %v304 = vld [vmem:[%s268 + $0x30] sm:$0xff]
        %v305 = vld [vmem:[%s268 + $0x38] sm:$0xff]
        %v306 = vld [vmem:[%s268 + $0x40] sm:$0xff]
        %v307 = vld [vmem:[%s268 + $0x48] sm:$0xff]
        %v308 = vld [vmem:[%s268 + $0x50] sm:$0xff]
        %v309 = vld [vmem:[%s268 + $0x58] sm:$0xff]
        %v310 = vld [vmem:[%s268 + $0x60] sm:$0xff]
        %v311 = vld [vmem:[%s268 + $0x68] sm:$0xff]
        %v312 = vld [vmem:[%s268 + $0x70] sm:$0xff]
        %v313 = vld [vmem:[%s268 + $0x78] sm:$0xff]
        %v314 = vld [vmem:[#allocation2] sm:$0xff]
        %vm315 = vcmask 261120
        %v317 = vsel %vm315, %v314, 0
        %v320 = vsel %vm315, %v282, 0
        %v323 = vsel %vm315, %v283, 0
        %v326 = vsel %vm315, %v284, 0
        %v329 = vsel %vm315, %v285, 0
        %v332 = vsel %vm315, %v286, 0
        %v335 = vsel %vm315, %v287, 0
        %v338 = vsel %vm315, %v288, 0
        %v341 = vsel %vm315, %v289, 0
        %v344 = vsel %vm315, %v290, 0
        %v347 = vsel %vm315, %v291, 0
        %v350 = vsel %vm315, %v292, 0
        %v353 = vsel %vm315, %v293, 0
        %v356 = vsel %vm315, %v294, 0
        %v359 = vsel %vm315, %v295, 0
        %v362 = vsel %vm315, %v296, 0
        %v365 = vsel %vm315, %v297, 0
        %367 = vmatprep.subr.mxu0 0.0
        %368 = vmatpush1.xpose.msra.mxu0 %v320
        %369 = vmatprep.subr.mxu0 0.0
        %370 = vmatpush1.xpose.msra.mxu0 %v323
        %371 = vmatprep.subr.mxu0 0.0
        %372 = vmatpush1.xpose.msra.mxu0 %v326
        %373 = vmatprep.subr.mxu0 0.0
        %374 = vmatpush1.xpose.msra.mxu0 %v329
        %375 = vmatprep.subr.mxu0 0.0
        %376 = vmatpush1.xpose.msra.mxu0 %v332
        %377 = vmatprep.subr.mxu0 0.0
        %378 = vmatpush1.xpose.msra.mxu0 %v335
        %379 = vmatprep.subr.mxu0 0.0
        %380 = vmatpush1.xpose.msra.mxu0 %v338
        %381 = vmatprep.subr.mxu0 0.0
        %382 = vmatpush1.xpose.msra.mxu0 %v341
        %383 = vmatprep.subr.mxu0 0.0
        %384 = vmatpush1.xpose.msra.mxu0 %v344
        %385 = vmatprep.subr.mxu0 0.0
        %386 = vmatpush1.xpose.msra.mxu0 %v347
        %387 = vmatprep.subr.mxu0 0.0
        %388 = vmatpush1.xpose.msra.mxu0 %v350
        %389 = vmatprep.subr.mxu0 0.0
        %390 = vmatpush1.xpose.msra.mxu0 %v353
        %391 = vmatprep.subr.mxu0 0.0
        %392 = vmatpush1.xpose.msra.mxu0 %v356
        %393 = vmatprep.subr.mxu0 0.0
        %394 = vmatpush1.xpose.msra.mxu0 %v359
        %395 = vmatprep.subr.mxu0 0.0
        %396 = vmatpush1.xpose.msra.mxu0 %v362
        %397 = vmatprep.subr.mxu0 0.0
        %398 = vmatpush1.xpose.msra.mxu0 %v365
        %399 = vmatprep.subr.mxu0 0.0
        %400 = vmatpush1.xpose.msra.mxu0 0.0
        %401 = vmatprep.subr.mxu0 0.0
        %402 = vmatpush1.xpose.msra.mxu0 0.0
        %403 = vmatprep.subr.mxu0 0.0
        %404 = vmatpush1.xpose.msra.mxu0 0.0
        %405 = vmatprep.subr.mxu0 0.0
        %406 = vmatpush1.xpose.msra.mxu0 0.0
        %407 = vmatprep.subr.mxu0 0.0
        %408 = vmatpush1.xpose.msra.mxu0 0.0
        %409 = vmatprep.subr.mxu0 0.0
        %410 = vmatpush1.xpose.msra.mxu0 0.0
        %411 = vmatprep.subr.mxu0 0.0
        %412 = vmatpush1.xpose.msra.mxu0 0.0
        %413 = vmatprep.subr.mxu0 0.0
        %414 = vmatpush1.xpose.msra.mxu0 0.0
        %415 = vmatprep.subr.mxu0 0.0
        %416 = vmatpush1.xpose.msra.mxu0 0.0
        %417 = vmatprep.subr.mxu0 0.0
        %418 = vmatpush1.xpose.msra.mxu0 0.0
        %419 = vmatprep.subr.mxu0 0.0
        %420 = vmatpush1.xpose.msra.mxu0 0.0
        %421 = vmatprep.subr.mxu0 0.0
        %422 = vmatpush1.xpose.msra.mxu0 0.0
        %423 = vmatprep.subr.mxu0 0.0
        %424 = vmatpush1.xpose.msra.mxu0 0.0
        %425 = vmatprep.subr.mxu0 0.0
        %426 = vmatpush1.xpose.msra.mxu0 0.0
        %427 = vmatprep.subr.mxu0 0.0
        %428 = vmatpush1.xpose.msra.mxu0 0.0
        %429 = vmatprep.subr.mxu0 0.0
        %430 = vmatpush1.xpose.msra.mxu0 0.0
        %431 = vmatprep.mubr.f32.mxu0 0.0
        %432 = vmatmul.mubr.f32.gmra.mrb[0].mxu0 %v317
        %v433 = vpop.f32.mrb[0].mxu0
        %v434 = vadd.f32 0.0, %v433
        %v435 = vpop.f32.mrb[0].mxu0
        %436 = vdwg.mxu0
        %p437 = scmp.ne.s32.totalorder %s24, 0
        // Predicated region
        $region37: #{tpu_custom_call.1} parent=31 // pred_check
          %p438 = pneg %p437
        $region38: #{tpu_custom_call.1} parent=31 // pred_check_branch
          %440 = sbr.rel (%p438) target = $region40
        $region39: #{tpu_custom_call.1} parent=31 // pred_region
          %v441 = vld [vmem:[#allocation3] sm:$0xff]
          %442 = vmax.xlane.f32.xlu0 %v434
          %v443 = vpop.xlane.xlu0 %442
          %v444 = vmax.f32 %v441, %v443
          %v445 = vsub.f32 %v441, %v444
          %v446 = vmul.f32 %v445, 1.442695
          %v447 = vpow.pop %v446
          %449 = vset.pattern.permute.xlu0 0
          %450 = vperm.xlu0 %449, %v444
          %v451 = vpop.permute.xlu0 %450
          %v453 = vsub.f32 %v434, %v451
          %v454 = vmul.f32 %v453, 1.442695
          %v455 = vpow.pop %v454
          %v456 = vld [vmem:[#allocation4] sm:$0xff]
          %v457 = vmul.f32 %v447, %v456
          %458 = vadd.xlane.f32.xlu0 %v455
          %v459 = vpop.xlane.xlu0 %458
          %v460 = vadd.f32 %v457, %v459
          %vm461 = vcmask 7168
          %462 = vst.msk [vmem:[#allocation4] sm:$0xff] %vm461, %v460
          %v463 = vld [vmem:[#allocation5] sm:$0xff]
          %465 = vset.pattern.permute.xlu0 0
          %466 = vperm.xlu0 %465, %v447
          %v467 = vpop.permute.xlu0 %466
          %v469 = vmul.f32 %v467, %v463
          %470 = vmatprep.subr.mxu0 0.0
          %471 = vmatpush1.msra.mxu0 %v298
          %472 = vmatprep.subr.mxu0 0.0
          %473 = vmatpush1.msra.mxu0 %v299
          %474 = vmatprep.subr.mxu0 0.0
          %475 = vmatpush1.msra.mxu0 %v300
          %476 = vmatprep.subr.mxu0 0.0
          %477 = vmatpush1.msra.mxu0 %v301
          %478 = vmatprep.subr.mxu0 0.0
          %479 = vmatpush1.msra.mxu0 %v302
          %480 = vmatprep.subr.mxu0 0.0
          %481 = vmatpush1.msra.mxu0 %v303
          %482 = vmatprep.subr.mxu0 0.0
          %483 = vmatpush1.msra.mxu0 %v304
          %484 = vmatprep.subr.mxu0 0.0
          %485 = vmatpush1.msra.mxu0 %v305
          %486 = vmatprep.subr.mxu0 0.0
          %487 = vmatpush1.msra.mxu0 %v306
          %488 = vmatprep.subr.mxu0 0.0
          %489 = vmatpush1.msra.mxu0 %v307
          %490 = vmatprep.subr.mxu0 0.0
          %491 = vmatpush1.msra.mxu0 %v308
          %492 = vmatprep.subr.mxu0 0.0
          %493 = vmatpush1.msra.mxu0 %v309
          %494 = vmatprep.subr.mxu0 0.0
          %495 = vmatpush1.msra.mxu0 %v310
          %496 = vmatprep.subr.mxu0 0.0
          %497 = vmatpush1.msra.mxu0 %v311
          %498 = vmatprep.subr.mxu0 0.0
          %499 = vmatpush1.msra.mxu0 %v312
          %500 = vmatprep.subr.mxu0 0.0
          %501 = vmatpush1.msra.mxu0 %v313
          %502 = vmatprep.subr.mxu0 0.0
          %503 = vmatpush1.msra.mxu0 0.0
          %504 = vmatprep.subr.mxu0 0.0
          %505 = vmatpush1.msra.mxu0 0.0
          %506 = vmatprep.subr.mxu0 0.0
          %507 = vmatpush1.msra.mxu0 0.0
          %508 = vmatprep.subr.mxu0 0.0
          %509 = vmatpush1.msra.mxu0 0.0
          %510 = vmatprep.subr.mxu0 0.0
          %511 = vmatpush1.msra.mxu0 0.0
          %512 = vmatprep.subr.mxu0 0.0
          %513 = vmatpush1.msra.mxu0 0.0
          %514 = vmatprep.subr.mxu0 0.0
          %515 = vmatpush1.msra.mxu0 0.0
          %516 = vmatprep.subr.mxu0 0.0
          %517 = vmatpush1.msra.mxu0 0.0
          %518 = vmatprep.subr.mxu0 0.0
          %519 = vmatpush1.msra.mxu0 0.0
          %520 = vmatprep.subr.mxu0 0.0
          %521 = vmatpush1.msra.mxu0 0.0
          %522 = vmatprep.subr.mxu0 0.0
          %523 = vmatpush1.msra.mxu0 0.0
          %524 = vmatprep.subr.mxu0 0.0
          %525 = vmatpush1.msra.mxu0 0.0
          %526 = vmatprep.subr.mxu0 0.0
          %527 = vmatpush1.msra.mxu0 0.0
          %528 = vmatprep.subr.mxu0 0.0
          %529 = vmatpush1.msra.mxu0 0.0
          %530 = vmatprep.subr.mxu0 0.0
          %531 = vmatpush1.msra.mxu0 0.0
          %532 = vmatprep.subr.mxu0 0.0
          %533 = vmatpush1.msra.mxu0 0.0
          %534 = vmatprep.mubr.f32.mxu0 0.0
          %535 = vmatmul.mubr.f32.gmra.mrb[0].mxu0 %v455
          %v536 = vpop.f32.mrb[0].mxu0
          %v537 = vadd.f32 0.0, %v536
          %v538 = vpop.f32.mrb[0].mxu0
          %539 = vdwg.mxu0
          %v540 = vadd.f32 %v469, %v537
          %541 = vst.msk [vmem:[#allocation5] sm:$0xff] %vm315, %v540
          %542 = vst.msk [vmem:[#allocation3] sm:$0xff] %vm461, %v444
        $region40: #{tpu_custom_call.1} parent=31 // pred_fallthru
          _
        // Predicated region
        $region41: #{tpu_custom_call.1} parent=31 // pred_check
          %p543 = pneg %p270
        $region42: #{tpu_custom_call.1} parent=31 // pred_check_branch
          %545 = sbr.rel (%p543) target = $region44
        $region43: #{tpu_custom_call.1} parent=31 // pred_region
          %s546 = smul.u32 %s24, 128
          %v547 = vlaneseq
          %v548 = vand.u32 %v547, 127
          %v549 = vstv %s546
          %v550 = vadd.s32 %v549, %v548
          %vm551 = vcmp.lt.s32.totalorder %v550, 8
          %v552 = vsel %vm551, 0.0, -3.4028235e+38
          %v553 = vadd.f32 %v434, %v552
          %v554 = vld [vmem:[#allocation3] sm:$0xff]
          %555 = vmax.xlane.f32.xlu0 %v553
          %v556 = vpop.xlane.xlu0 %555
          %v557 = vmax.f32 %v554, %v556
          %v558 = vsub.f32 %v554, %v557
          %v559 = vmul.f32 %v558, 1.442695
          %v560 = vpow.pop %v559
          %562 = vset.pattern.permute.xlu0 0
          %563 = vperm.xlu0 %562, %v557
          %v564 = vpop.permute.xlu0 %563
          %v566 = vsub.f32 %v553, %v564
          %v567 = vmul.f32 %v566, 1.442695
          %v568 = vpow.pop %v567
          %v569 = vld [vmem:[#allocation4] sm:$0xff]
          %v570 = vmul.f32 %v560, %v569
          %571 = vadd.xlane.f32.xlu0 %v568
          %v572 = vpop.xlane.xlu0 %571
          %v573 = vadd.f32 %v570, %v572
          %vm574 = vcmask 7168
          %575 = vst.msk [vmem:[#allocation4] sm:$0xff] %vm574, %v573
          %v576 = vld [vmem:[#allocation5] sm:$0xff]
          %578 = vset.pattern.permute.xlu0 0
          %579 = vperm.xlu0 %578, %v560
          %v580 = vpop.permute.xlu0 %579
          %v582 = vmul.f32 %v580, %v576
          %583 = vmatprep.subr.mxu0 0.0
          %584 = vmatpush1.msra.mxu0 %v298
          %585 = vmatprep.subr.mxu0 0.0
          %586 = vmatpush1.msra.mxu0 %v299
          %587 = vmatprep.subr.mxu0 0.0
          %588 = vmatpush1.msra.mxu0 %v300
          %589 = vmatprep.subr.mxu0 0.0
          %590 = vmatpush1.msra.mxu0 %v301
          %591 = vmatprep.subr.mxu0 0.0
          %592 = vmatpush1.msra.mxu0 %v302
          %593 = vmatprep.subr.mxu0 0.0
          %594 = vmatpush1.msra.mxu0 %v303
          %595 = vmatprep.subr.mxu0 0.0
          %596 = vmatpush1.msra.mxu0 %v304
          %597 = vmatprep.subr.mxu0 0.0
          %598 = vmatpush1.msra.mxu0 %v305
          %599 = vmatprep.subr.mxu0 0.0
          %600 = vmatpush1.msra.mxu0 %v306
          %601 = vmatprep.subr.mxu0 0.0
          %602 = vmatpush1.msra.mxu0 %v307
          %603 = vmatprep.subr.mxu0 0.0
          %604 = vmatpush1.msra.mxu0 %v308
          %605 = vmatprep.subr.mxu0 0.0
          %606 = vmatpush1.msra.mxu0 %v309
          %607 = vmatprep.subr.mxu0 0.0
          %608 = vmatpush1.msra.mxu0 %v310
          %609 = vmatprep.subr.mxu0 0.0
          %610 = vmatpush1.msra.mxu0 %v311
          %611 = vmatprep.subr.mxu0 0.0
          %612 = vmatpush1.msra.mxu0 %v312
          %613 = vmatprep.subr.mxu0 0.0
          %614 = vmatpush1.msra.mxu0 %v313
          %615 = vmatprep.subr.mxu0 0.0
          %616 = vmatpush1.msra.mxu0 0.0
          %617 = vmatprep.subr.mxu0 0.0
          %618 = vmatpush1.msra.mxu0 0.0
          %619 = vmatprep.subr.mxu0 0.0
          %620 = vmatpush1.msra.mxu0 0.0
          %621 = vmatprep.subr.mxu0 0.0
          %622 = vmatpush1.msra.mxu0 0.0
          %623 = vmatprep.subr.mxu0 0.0
          %624 = vmatpush1.msra.mxu0 0.0
          %625 = vmatprep.subr.mxu0 0.0
          %626 = vmatpush1.msra.mxu0 0.0
          %627 = vmatprep.subr.mxu0 0.0
          %628 = vmatpush1.msra.mxu0 0.0
          %629 = vmatprep.subr.mxu0 0.0
          %630 = vmatpush1.msra.mxu0 0.0
          %631 = vmatprep.subr.mxu0 0.0
          %632 = vmatpush1.msra.mxu0 0.0
          %633 = vmatprep.subr.mxu0 0.0
          %634 = vmatpush1.msra.mxu0 0.0
          %635 = vmatprep.subr.mxu0 0.0
          %636 = vmatpush1.msra.mxu0 0.0
          %637 = vmatprep.subr.mxu0 0.0
          %638 = vmatpush1.msra.mxu0 0.0
          %639 = vmatprep.subr.mxu0 0.0
          %640 = vmatpush1.msra.mxu0 0.0
          %641 = vmatprep.subr.mxu0 0.0
          %642 = vmatpush1.msra.mxu0 0.0
          %643 = vmatprep.subr.mxu0 0.0
          %644 = vmatpush1.msra.mxu0 0.0
          %645 = vmatprep.subr.mxu0 0.0
          %646 = vmatpush1.msra.mxu0 0.0
          %647 = vmatprep.mubr.f32.mxu0 0.0
          %648 = vmatmul.mubr.f32.gmra.mrb[0].mxu0 %v568
          %v649 = vpop.f32.mrb[0].mxu0
          %v650 = vadd.f32 0.0, %v649
          %v651 = vpop.f32.mrb[0].mxu0
          %652 = vdwg.mxu0
          %v653 = vadd.f32 %v582, %v650
          %654 = vst.msk [vmem:[#allocation5] sm:$0xff] %vm315, %v653
          %655 = vst.msk [vmem:[#allocation3] sm:$0xff] %vm574, %v557
          %v656 = vld [vmem:[#allocation4] sm:$0xff]
          %v657 = vrcp.pop %v656
          %v658 = vld [vmem:[#allocation5] sm:$0xff]
          %660 = vset.pattern.permute.xlu0 0
          %661 = vperm.xlu0 %660, %v657
          %v662 = vpop.permute.xlu0 %661
          %v664 = vmul.f32 %v658, %v662
          %665 = vst.msk [vmem:[%s242] sm:$0xff] %vm315, %v664
        $region44: #{tpu_custom_call.1} parent=31 // pred_fallthru
          _
        %s666 = sand.u32 %s130, 1
        %s667 = scalar_lea.sflag [#allocation7], %s666
        %s668 = sand.u32 %s130, 1
        %s669 = smul.addr %s668, 8
        %s670 = scalar_lea.vmem [#allocation6], %s669
        // Predicated region
        $region45: #{tpu_custom_call.1} parent=31 // pred_check
          %p671 = pneg %p140
        $region46: #{tpu_custom_call.1} parent=31 // pred_check_branch
          %673 = sbr.rel (%p671) target = $region48
        $region47: #{tpu_custom_call.1} parent=31 // pred_region
          %s675 = ssub.s32 128, 128
          %676 = vsyncadd %s667, %s675
          %s677 = sadd.s32 %s23, %s22
          %s678 = smul.addr %s677, 128
          %s679 = scalar_lea.hbm %s3, %s678
          %s681 = sshll.u32 %s670, 4
          %s682 = int_to_ptr.vmem [resolvable:$true] %s681
          %684 = dma.vmem_to_hbm [thread:$0]  %s682, 128, %s679, %s667
        $region48: #{tpu_custom_call.1} parent=31 // pred_fallthru
          _
      $region32: #{tpu_custom_call.1} parent=5 // pred_fallthru
        _
      %p685 = scmp.le.s32.totalorder 2, %s12
      // Predicated region
      $region49: #{tpu_custom_call.1} parent=5 // pred_check
        %p686 = pneg %p685
      $region50: #{tpu_custom_call.1} parent=5 // pred_check_branch
        %688 = sbr.rel (%p686) target = $region52
      $region51: #{tpu_custom_call.1} parent=5 // pred_region
        %s689 = ssub.s32 %s12, 2
        // Predicated region
        $region53: #{tpu_custom_call.1} parent=51 // pred_check
          %p690 = pneg %p146
        $region54: #{tpu_custom_call.1} parent=51 // pred_check_branch
          %692 = sbr.rel (%p690) target = $region56
        $region55: #{tpu_custom_call.1} parent=51 // pred_region
          %s693 = sand.u32 %s131, 1
          %s694 = scalar_lea.sflag [#allocation7], %s693
          %s695 = sand.u32 %s131, 1
          %s696 = smul.addr %s695, 8
          %s697 = scalar_lea.vmem [#allocation6], %s696
          %698 = dma.done %s694, 128
        $region56: #{tpu_custom_call.1} parent=51 // pred_fallthru
          _
      $region52: #{tpu_custom_call.1} parent=5 // pred_fallthru
        _
    $region6: #{tpu_custom_call.1} parent=1 // loop_footer
      %s16 = sadd.s32 1, %s12
    $region7: #{tpu_custom_call.1} parent=1 // loop_footer_branch
      %11 = sbr.rel target = $region3
    $region8: #{tpu_custom_call.1} parent=1 // loop_exit
      _
    %699 = vsyncpa [#allocation7], 1
    %s700 = scalar_lea.sflag [#allocation7], 1
    %701 = vsyncpa %s700, 1

</llo_original>
